<compile_context>
chip_gen: v5e
topology: v5e:2x2
jax: 0.10.0
libtpu: 0.0.40
codegen_flags: <defaults>
</compile_context>

<pallas_src>
import functools

import jax
import jax.numpy as jnp
from jax.experimental import pallas as pl
from jax.experimental.pallas import tpu as pltpu

# Retune per generation once tiles grow: v5e/v6e can go to 64-100 MiB; on v7x (64 MiB
# physical VMEM) keep <= ~48 MiB and shrink residency instead of raising the limit.
_VMEM_LIMIT = 48 * 1024 * 1024


def _conv_stats_kernel(x_ref, w_ref, y_ref, stats_ref, stat_acc, *, kh_taps):
    # x_ref     : (1, Hp, Kp)        padded image rows (f32), lane layout (w, ci); resident per image
    # w_ref     : (KH*Kp, Wo)        banded conv matrix (bf16); resident across the whole grid
    # y_ref     : (1, TH, Wo)        conv output row tile (bf16), lane layout (w, co) -- lane-dense
    # stats_ref : (1, 2, Wo)         per-lane [sum; sum_sq] (f32), written at last t step
    # stat_acc  : (2, Wo)            VMEM f32 accumulator across the t axis
    t = pl.program_id(1)
    nt = pl.num_programs(1)
    TH = y_ref.shape[1]

    base = t * TH
    if TH % 8 == 0:
        base = pl.multiple_of(base, 8)          # aligned-load hint for the row window

    # Gather the KH row-shifted views (f32 loads, proven lowering), cast to bf16 for the
    # MXU fast path, and fold the taps into a single K = KH*Kp matmul (one RHS push).
    # TODO(synk): store x in bf16 too once packed-dtype dynamic row-slicing is validated.
    taps = [x_ref[0, pl.ds(base + kh, TH), :].astype(w_ref.dtype) for kh in range(kh_taps)]
    lhs = jnp.concatenate(taps, axis=1)                                   # (TH, KH*Kp) bf16
    acc = jnp.dot(lhs, w_ref[...], preferred_element_type=jnp.float32)    # f32 accumulate
    y_ref[0] = acc.astype(y_ref.dtype)                                    # bf16 writeback

    @pl.when(t == 0)
    def _():
        stat_acc[...] = jnp.zeros_like(stat_acc)

    # Stats from the f32 accumulator, single (2, Wo) store per step (no masked sub-slices).
    stat_acc[...] = stat_acc[...] + jnp.concatenate(
        [jnp.sum(acc, axis=0, keepdims=True),
         jnp.sum(acc * acc, axis=0, keepdims=True)], axis=0)

    @pl.when(t == nt - 1)
    def _():
        stats_ref[0] = stat_acc[...]


def _bn_lrelu_kernel(y_ref, scale_ref, shift_ref, o_ref, *, slope):
    # Fused BN affine + LeakyReLU on the bf16 intermediate: f32 FMA, then max(t, slope*t).
    t = y_ref[...].astype(jnp.float32) * scale_ref[...] + shift_ref[...]
    o_ref[...] = jnp.maximum(t, slope * t).astype(o_ref.dtype)


def _pick_tile(n, target):
    """Largest tile <= target dividing n that keeps the (8,128) layout rule legal."""
    if n <= target:
        return n
    for d in range(target, 0, -1):
        if n % d == 0 and d % 8 == 0:
            return d
    return n


def _build_banded_weights(w_hwio, W, pad, Kp):
    """Banded conv matrices folded along K: out[(kh*Kp)+(w+kw)*Cin+ci, w*Cout+co] = w[kh,kw,ci,co].

    TODO(synk): cache per weight update / hoist out of the per-forward hot path; for
    Cin >~ 32 switch to an im2col/shifted-matmul formulation (banded K is mostly zeros).
    """
    KH, KW, Cin, Cout = w_hwio.shape
    Wp = W + 2 * pad
    Wo = W * Cout
    eye_w = jnp.eye(W, dtype=jnp.float32)
    mats = []
    for kh in range(KH):
        b = jnp.zeros((Wp * Cin, Wo), jnp.float32)
        for kw in range(KW):
            blk = jnp.einsum('wv,io->wivo', eye_w, w_hwio[kh, kw]).reshape(W * Cin, Wo)
            b = b + jnp.pad(blk, ((kw * Cin, (Wp - W - kw) * Cin), (0, 0)))
        mats.append(b)
    wmat = jnp.pad(jnp.stack(mats), ((0, 0), (0, Kp - Wp * Cin), (0, 0)))  # (KH, Kp, Wo)
    return wmat.reshape(KH * Kp, Wo)


def conv_block_forward(x_nchw, w_oihw, bias, gamma, beta,
                       *, eps=1e-5, slope=0.2, block_h=None, block_rows=2048,
                       out_dtype=jnp.float32, channels_last=False):
    """ConvBlock forward (Conv2d 3x3 s1 p1 -> BatchNorm2d train-mode -> LeakyReLU 0.2).

    Inputs follow PyTorch conventions (NCHW activations, OIHW weights). `bias` is
    accepted for API parity but is mathematically cancelled by the training-mode
    BatchNorm mean subtraction, so it is not used by the kernels.
    """
    del bias  # exactly cancelled by train-mode BN (mean subtraction); saves a VPU pass

    x = jnp.transpose(x_nchw, (0, 2, 3, 1)).astype(jnp.float32)   # NHWC
    w = jnp.transpose(w_oihw, (2, 3, 1, 0)).astype(jnp.float32)   # HWIO
    N, H, W, Cin = x.shape
    KH, KW, _, Cout = w.shape
    pad = 1
    Hp = H + 2 * pad
    Wp = W + 2 * pad
    Wo = W * Cout                                # lane-dense output row width (=128 here)
    Kp = ((Wp * Cin + 127) // 128) * 128         # per-tap K padded to a lane multiple

    # ---- operand layouts -----------------------------------------------------
    xp = jnp.pad(x, ((0, 0), (pad, pad), (pad, pad), (0, 0)))
    x2 = jnp.pad(xp.reshape(N, Hp, Wp * Cin),
                 ((0, 0), (0, 0), (0, Kp - Wp * Cin)))            # (N, Hp, Kp) f32
    wmat = _build_banded_weights(w, W, pad, Kp).astype(jnp.bfloat16)   # (KH*Kp, Wo) bf16

    # ---- pass 1: conv + per-lane stats (grid: batch parallel, row-tiles arbitrary) ----
    # Keep TH >= 128 in production; the toy H here forces smaller tiles.
    TH = _pick_tile(H, block_h if block_h is not None else 256)
    grid1 = (N, H // TH)
    flops1 = 2 * N * H * KH * Kp * Wo
    bytes1 = 4 * x2.size + 2 * wmat.size + 2 * N * H * Wo + 4 * N * 2 * Wo

    # TODO(synk): for large H / Cin on v7x, swap the resident (1,Hp,Kp) image for a halo
    # row tile and single-buffer the invariant weight block to fit 64 MiB VMEM.
    conv, stats = pl.pallas_call(
        functools.partial(_conv_stats_kernel, kh_taps=KH),
        out_shape=(
            jax.ShapeDtypeStruct((N, H, Wo), jnp.bfloat16),       # bf16 intermediate
            jax.ShapeDtypeStruct((N, 2, Wo), jnp.float32),        # [sum; sum_sq] per lane
        ),
        grid=grid1,
        in_specs=[
            pl.BlockSpec((1, Hp, Kp), lambda n, t: (n, 0, 0)),    # image resident across t
            pl.BlockSpec((KH * Kp, Wo), lambda n, t: (0, 0)),     # weights resident always
        ],
        out_specs=(
            pl.BlockSpec((1, TH, Wo), lambda n, t: (n, t, 0)),    # lane-dense conv tile
            pl.BlockSpec((1, 2, Wo), lambda n, t: (n, 0, 0)),     # stats (accumulator block)
        ),
        scratch_shapes=[pltpu.VMEM((2, Wo), jnp.float32)],
        compiler_params=pltpu.CompilerParams(
            dimension_semantics=("parallel", "arbitrary"),
            vmem_limit_bytes=_VMEM_LIMIT,
        ),
        cost_estimate=pl.CostEstimate(flops=flops1, transcendentals=0,
                                      bytes_accessed=bytes1),
    )(x2, wmat)

    # ---- fold BN stats + affine into per-channel scale/shift (tiny vectors) ----------
    # TODO(synk): E[x^2]-E[x]^2 in f32 is cancellation-prone for very large N*H*W; switch
    # to a centered / Welford accumulation if shapes grow.
    count = N * H * W
    s = stats.sum(axis=0)                                          # (2, Wo)
    s1_c = s[0].reshape(W, Cout).sum(axis=0)
    s2_c = s[1].reshape(W, Cout).sum(axis=0)
    mean = s1_c / count
    var = jnp.maximum(s2_c / count - mean * mean, 0.0)             # biased variance
    scale = gamma.astype(jnp.float32) * jax.lax.rsqrt(var + eps)
    shift = beta.astype(jnp.float32) - mean * scale
    scale_l = jnp.tile(scale, W)[None, :]                          # (1, Wo) lane layout (w, co)
    shift_l = jnp.tile(shift, W)[None, :]

    # ---- pass 2: fused scale/shift + LeakyReLU over row tiles ------------------------
    rows = N * H
    TR = _pick_tile(rows, block_rows)
    y2 = conv.reshape(rows, Wo)                                    # bf16, no copy
    flops2 = 4 * rows * Wo
    bytes2 = 2 * rows * Wo + jnp.dtype(out_dtype).itemsize * rows * Wo + 2 * 4 * Wo

    out = pl.pallas_call(
        functools.partial(_bn_lrelu_kernel, slope=slope),
        out_shape=jax.ShapeDtypeStruct((rows, Wo), out_dtype),
        grid=(rows // TR,),
        in_specs=[
            pl.BlockSpec((TR, Wo), lambda i: (i, 0)),
            pl.BlockSpec((1, Wo), lambda i: (0, 0)),
            pl.BlockSpec((1, Wo), lambda i: (0, 0)),
        ],
        out_specs=pl.BlockSpec((TR, Wo), lambda i: (i, 0)),
        compiler_params=pltpu.CompilerParams(
            dimension_semantics=("parallel",),
            vmem_limit_bytes=_VMEM_LIMIT,
        ),
        cost_estimate=pl.CostEstimate(flops=flops2, transcendentals=0,
                                      bytes_accessed=bytes2),
    )(y2, scale_l, shift_l)

    nhwc = out.reshape(N, H, W, Cout)
    if channels_last:
        return nhwc                                                # lane-dense, no extra HBM pass
    # TODO(synk): the NCHW transpose below is a separate full-HBM XLA pass; downstream
    # consumers should take channels_last=True and keep the lane-dense slab.
    return jnp.transpose(nhwc, (0, 3, 1, 2))


def _reference(x_nchw, w_oihw, bias, gamma, beta):
    y = jax.lax.conv_general_dilated(
        x_nchw, w_oihw, window_strides=(1, 1), padding=((1, 1), (1, 1)),
        dimension_numbers=("NCHW", "OIHW", "NCHW"))
    y = y + bias[None, :, None, None]
    mean = y.mean(axis=(0, 2, 3), keepdims=True)
    var = ((y - mean) ** 2).mean(axis=(0, 2, 3), keepdims=True)
    y = (y - mean) / jnp.sqrt(var + 1e-5)
    y = y * gamma[None, :, None, None] + beta[None, :, None, None]
    return jnp.where(y >= 0, y, 0.2 * y)


if __name__ == "__main__":
    # Small shapes consistent with ConvBlock(in_fea=4, out_fea=8); H=32 so the multi-tile
    # stat-accumulation path can be exercised with bf16-friendly 16-row tiles.
    N, Cin, Cout, Hh, Ww = 2, 4, 8, 32, 16
    key = jax.random.PRNGKey(0)
    kx, kw, kb = jax.random.split(key, 3)

    x = jax.random.normal(kx, (N, Cin, Hh, Ww), dtype=jnp.float32)
    fan_in = Cin * 3 * 3
    bound = 1.0 / (fan_in ** 0.5)
    w = jax.random.uniform(kw, (Cout, Cin, 3, 3), minval=-bound, maxval=bound,
                           dtype=jnp.float32)
    b = jax.random.uniform(kb, (Cout,), minval=-bound, maxval=bound,
                           dtype=jnp.float32)
    gamma = jnp.ones((Cout,), jnp.float32)   # BatchNorm weight default
    beta = jnp.zeros((Cout,), jnp.float32)   # BatchNorm bias default
    # TODO(synk): dropout branch omitted — default ConvBlock has dropout=None (no Dropout2d layer).

    ref = _reference(x, w, b, gamma, beta)

    # block_h=None -> single row tile (TH=H); block_h=16 -> two tiles, exercising the
    # cross-tile VMEM stat accumulator. bf16 MXU operands / bf16 intermediate => looser tol.
    for bh in (None, 16):
        out = jax.block_until_ready(conv_block_forward(x, w, b, gamma, beta, block_h=bh))
        assert out.shape == (N, Cout, Hh, Ww)
        assert jnp.allclose(out, ref, atol=1e-1, rtol=1e-1), (
            f"mismatch vs reference (block_h={bh}): "
            f"max abs err {jnp.max(jnp.abs(out - ref))}")

    print("KERNEL_OK")
</pallas_src>

<mosaic_0001>
module attributes {stable_mosaic.version = 11 : i64} {
  func.func @_conv_stats_kernel(%arg0: i32, %arg1: i32, %arg2: memref<1x34x128xf32, #tpu.memory_space<vmem>>, %arg3: memref<384x128xbf16, #tpu.memory_space<vmem>>, %arg4: memref<1x32x128xbf16, #tpu.memory_space<vmem>>, %arg5: memref<1x2x128xf32, #tpu.memory_space<vmem>>, %arg6: memref<2x128xf32, #tpu.memory_space<vmem>>) attributes {dimension_semantics = [#tpu.dimension_semantics<parallel>, #tpu.dimension_semantics<arbitrary>], iteration_bounds = array<i64: 2, 1>, scalar_prefetch = 0 : i64, scratch_operands = 1 : i64, tpu.core_type = #tpu.core_type<tc>, window_params = [{transform_indices = @transform_0, window_bounds = array<i64: 1, 34, 128>}, {pipeline_mode = #tpu.pipeline_mode<synchronous>, transform_indices = @transform_1, window_bounds = array<i64: 384, 128>}, {transform_indices = @transform_2, window_bounds = array<i64: 1, 32, 128>}, {transform_indices = @transform_3, window_bounds = array<i64: 1, 2, 128>}]} {
    %c32_i32 = arith.constant 32 : i32
    %0 = arith.muli %arg1, %c32_i32 : i32
    %1 = tpu.assume_multiple %0, 8 : i32
    %c0_i32 = arith.constant 0 : i32
    %2 = arith.addi %1, %c0_i32 : i32
    %c0 = arith.constant 0 : index
    %3 = arith.index_cast %2 : i32 to index
    %c0_0 = arith.constant 0 : index
    %4 = vector.load %arg2[%c0, %3, %c0_0] : memref<1x34x128xf32, #tpu.memory_space<vmem>>, vector<1x32x128xf32>
    %5 = vector.shape_cast %4 : vector<1x32x128xf32> to vector<32x128xf32>
    %6 = arith.truncf %5 : vector<32x128xf32> to vector<32x128xbf16>
    %c1_i32 = arith.constant 1 : i32
    %7 = arith.addi %1, %c1_i32 : i32
    %c0_1 = arith.constant 0 : index
    %8 = arith.index_cast %7 : i32 to index
    %c0_2 = arith.constant 0 : index
    %9 = vector.load %arg2[%c0_1, %8, %c0_2] : memref<1x34x128xf32, #tpu.memory_space<vmem>>, vector<1x32x128xf32>
    %10 = vector.shape_cast %9 : vector<1x32x128xf32> to vector<32x128xf32>
    %11 = arith.truncf %10 : vector<32x128xf32> to vector<32x128xbf16>
    %c2_i32 = arith.constant 2 : i32
    %12 = arith.addi %1, %c2_i32 : i32
    %c0_3 = arith.constant 0 : index
    %13 = arith.index_cast %12 : i32 to index
    %c0_4 = arith.constant 0 : index
    %14 = vector.load %arg2[%c0_3, %13, %c0_4] : memref<1x34x128xf32, #tpu.memory_space<vmem>>, vector<1x32x128xf32>
    %15 = vector.shape_cast %14 : vector<1x32x128xf32> to vector<32x128xf32>
    %16 = arith.truncf %15 : vector<32x128xf32> to vector<32x128xbf16>
    %17 = tpu.concatenate %6, %11, %16 in 1 : vector<32x128xbf16>, vector<32x128xbf16>, vector<32x128xbf16> -> vector<32x384xbf16>
    %c0_5 = arith.constant 0 : index
    %c0_6 = arith.constant 0 : index
    %18 = vector.load %arg3[%c0_5, %c0_6] : memref<384x128xbf16, #tpu.memory_space<vmem>>, vector<384x128xbf16>
    %cst = arith.constant dense<0.000000e+00> : vector<32x128xf32>
    %19 = tpu.matmul %17, %18, %cst {dimension_numbers = #tpu.dot_dimension_numbers<[1], [0], [0], [1], [0, 0, 1, 1], [], []>} : vector<32x384xbf16>, vector<384x128xbf16>, vector<32x128xf32> -> vector<32x128xf32>
    %20 = arith.truncf %19 : vector<32x128xf32> to vector<32x128xbf16>
    %c0_7 = arith.constant 0 : index
    %c0_8 = arith.constant 0 : index
    %c0_9 = arith.constant 0 : index
    %21 = vector.load %arg4[%c0_7, %c0_8, %c0_9] : memref<1x32x128xbf16, #tpu.memory_space<vmem>>, vector<1x32x128xbf16>
    %22 = vector.shape_cast %21 : vector<1x32x128xbf16> to vector<32x128xbf16>
    %23 = vector.shape_cast %20 : vector<32x128xbf16> to vector<1x32x128xbf16>
    tpu.vector_store %arg4[%c0_7, %c0_8, %c0_9], %23 {strides = array<i32>} : memref<1x32x128xbf16, #tpu.memory_space<vmem>>, vector<1x32x128xbf16>,
    %c0_i32_10 = arith.constant 0 : i32
    %24 = arith.cmpi eq, %arg1, %c0_i32_10 : i32
    %25 = arith.extui %24 : i1 to i32
    %c0_i32_11 = arith.constant 0 : i32
    %26 = arith.cmpi ne, %25, %c0_i32_11 : i32
    scf.if %26 {
      %cst_20 = arith.constant 0.000000e+00 : f32
      %39 = vector.broadcast %cst_20 : f32 to vector<2x128xf32>
      %c0_21 = arith.constant 0 : index
      %c0_22 = arith.constant 0 : index
      %40 = vector.load %arg6[%c0_21, %c0_22] : memref<2x128xf32, #tpu.memory_space<vmem>>, vector<2x128xf32>
      tpu.vector_store %arg6[%c0_21, %c0_22], %39 {strides = array<i32>} : memref<2x128xf32, #tpu.memory_space<vmem>>, vector<2x128xf32>,
    } else {
    }
    %c0_12 = arith.constant 0 : index
    %c0_13 = arith.constant 0 : index
    %27 = vector.load %arg6[%c0_12, %c0_13] : memref<2x128xf32, #tpu.memory_space<vmem>>, vector<2x128xf32>
    %cst_14 = arith.constant dense<0.000000e+00> : vector<128xf32>
    %28 = vector.multi_reduction <add>, %19, %cst_14 [0] : vector<32x128xf32> to vector<128xf32>
    %29 = vector.shape_cast %28 : vector<128xf32> to vector<1x128xf32>
    %30 = arith.mulf %19, %19 : vector<32x128xf32>
    %cst_15 = arith.constant dense<0.000000e+00> : vector<128xf32>
    %31 = vector.multi_reduction <add>, %30, %cst_15 [0] : vector<32x128xf32> to vector<128xf32>
    %32 = vector.shape_cast %31 : vector<128xf32> to vector<1x128xf32>
    %33 = tpu.concatenate %29, %32 in 0 : vector<1x128xf32>, vector<1x128xf32> -> vector<2x128xf32>
    %34 = arith.addf %27, %33 : vector<2x128xf32>
    %c0_16 = arith.constant 0 : index
    %c0_17 = arith.constant 0 : index
    %35 = vector.load %arg6[%c0_16, %c0_17] : memref<2x128xf32, #tpu.memory_space<vmem>>, vector<2x128xf32>
    tpu.vector_store %arg6[%c0_16, %c0_17], %34 {strides = array<i32>} : memref<2x128xf32, #tpu.memory_space<vmem>>, vector<2x128xf32>,
    %c0_i32_18 = arith.constant 0 : i32
    %36 = arith.cmpi eq, %arg1, %c0_i32_18 : i32
    %37 = arith.extui %36 : i1 to i32
    %c0_i32_19 = arith.constant 0 : i32
    %38 = arith.cmpi ne, %37, %c0_i32_19 : i32
    scf.if %38 {
      %c0_20 = arith.constant 0 : index
      %c0_21 = arith.constant 0 : index
      %39 = vector.load %arg6[%c0_20, %c0_21] : memref<2x128xf32, #tpu.memory_space<vmem>>, vector<2x128xf32>
      %c0_22 = arith.constant 0 : index
      %c0_23 = arith.constant 0 : index
      %c0_24 = arith.constant 0 : index
      %40 = vector.load %arg5[%c0_22, %c0_23, %c0_24] : memref<1x2x128xf32, #tpu.memory_space<vmem>>, vector<1x2x128xf32>
      %41 = vector.shape_cast %40 : vector<1x2x128xf32> to vector<2x128xf32>
      %42 = vector.shape_cast %39 : vector<2x128xf32> to vector<1x2x128xf32>
      tpu.vector_store %arg5[%c0_22, %c0_23, %c0_24], %42 {strides = array<i32>} : memref<1x2x128xf32, #tpu.memory_space<vmem>>, vector<1x2x128xf32>,
    } else {
    }
    return
  }
  func.func @transform_0(%arg0: i32, %arg1: i32) -> (i32, i32, i32) {
    %c0_i32 = arith.constant 0 : i32
    %c0_i32_0 = arith.constant 0 : i32
    %c0_i32_1 = arith.constant 0 : i32
    return %arg0, %c0_i32, %c0_i32_0 : i32, i32, i32
  }
  func.func @transform_1(%arg0: i32, %arg1: i32) -> (i32, i32) {
    %c0_i32 = arith.constant 0 : i32
    %c0_i32_0 = arith.constant 0 : i32
    %c0_i32_1 = arith.constant 0 : i32
    return %c0_i32, %c0_i32_0 : i32, i32
  }
  func.func @transform_2(%arg0: i32, %arg1: i32) -> (i32, i32, i32) {
    %c0_i32 = arith.constant 0 : i32
    %c0_i32_0 = arith.constant 0 : i32
    return %arg0, %arg1, %c0_i32 : i32, i32, i32
  }
  func.func @transform_3(%arg0: i32, %arg1: i32) -> (i32, i32, i32) {
    %c0_i32 = arith.constant 0 : i32
    %c0_i32_0 = arith.constant 0 : i32
    %c0_i32_1 = arith.constant 0 : i32
    return %arg0, %c0_i32, %c0_i32_0 : i32, i32, i32
  }
}

</mosaic_0001>

<llo_original>
// kernel: tpu_custom_call.1
$region0: #{tpu_custom_call.1}
  #allocation0 [shape = 'u32[]', space=smem, size = 0x4, offset = 0x4, fixed_abs, tag = 'smem constant byte address 0x4 - core index']
  #allocation1 [shape = 'u32[72,128]{1,0:T(1,128)}', space=vmem, size = 0x9000, scoped, tag = 'internal scratch']
  #allocation2 [shape = 'f32[2,128]{1,0:T(2,128)}', space=vmem, size = 0x400, scoped, tag = 'scratch operand']
  %s0 = inlined_call_operand.vmem [shape: f32[2,34,128], index: 0, kind: input, shape index: {}]
  %s1 = inlined_call_operand.hbm [shape: bf16[384,128], index: 1, kind: input, shape index: {}]
  %s2 = inlined_call_operand.hbm [shape: bf16[2,32,128], index: 2, kind: output, shape index: {0}]
  %s3 = inlined_call_operand.hbm [shape: f32[2,2,128], index: 3, kind: output, shape index: {1}]
  %4 = xla_tuple %s2, %s3
  %s5 = sld [smem:[#allocation0]]
  $region61: #{tpu_custom_call.1} parent=0
    _
  %s7 = ssub.s32 1, %s5
  %s8 = scalar_select 0, %s7, %s5
  $region1: #{tpu_custom_call.1} parent=0
    #allocation3 [shape = 'u8[98304]{0}', space=vmem, size = 0x18000, scoped, tag = 'input window, operand 1, single buffered']
    #allocation4 [shape = 's32[2]{0}', space=sflag, size = 0x8, scoped, tag = 'scoped memory for tpu_custom_call.1']
    #allocation5 [shape = 's32[2]{0}', space=sflag, size = 0x8, scoped, tag = 'scoped memory for tpu_custom_call.1']
    #allocation6 [shape = 'u8[16384]{0}', space=vmem, size = 0x4000, scoped, tag = 'output window, operand 0']
    #allocation7 [shape = 'u8[2048]{0}', space=vmem, size = 0x800, scoped, tag = 'output window, operand 1']
    #allocation8 [shape = 's32[2]{0}', space=sflag, size = 0x8, scoped, tag = 'scoped memory for tpu_custom_call.1']
    %9 = vsyncpa [#allocation4], 0
    %10 = vsyncpa [#allocation5], 0
    %s11 = scalar_lea.sflag [#allocation5], 1
    %12 = vsyncpa %s11, 0
    %13 = vsyncpa [#allocation8], 0
    %s14 = scalar_lea.sflag [#allocation8], 1
    %15 = vsyncpa %s14, 0
    loop: start=0, step=1, limit=4
    $region2: #{tpu_custom_call.1} parent=1 // loop_pre_header
      _
    $region3: #{tpu_custom_call.1} parent=1 // loop_header
      %s17 = sphi 0, %s21
      %p18 = scmp.ge.s32.totalorder %s17, 4
      %s24 = sphi 0, %s36
      %s25 = sphi 0, %s32
      %s26 = sphi 0, %s24
      %s27 = sphi 0, %s25
      %s28 = sphi 0, %s26
      %s29 = sphi 0, %s27
      %s39 = sphi 0, %s41
      %s42 = sphi 0, %s39
      %s43 = sphi 0, %s42
      %s59 = sphi 0, %s43
      %s63 = sphi 0, %s63
      %s65 = sphi 0, %s63
      %s66 = sphi 0, %s65
      %s80 = sphi 0, %s66
      %s88 = sphi 0, %s90
      %s91 = sphi 0, %s88
      %s92 = sphi 0, %s91
      %s108 = sphi 0, %s92
      %s114 = sphi 0, %s116
      %s117 = sphi 0, %s114
      %s118 = sphi 0, %s117
      %s134 = sphi 0, %s118
    $region4: #{tpu_custom_call.1} parent=1 // loop_header_branch
      %20 = sbr.rel (%p18) target = $region8
    $region5: #{tpu_custom_call.1} parent=1 // loop_body
      %s22 = ssub.s32 %s17, 1
      %s23 = ssub.s32 %s17, 2
      %s30 = sadd.s32 1, %s25
      %p31 = scmp.ge.s32.totalorder %s30, 1
      %s32 = scalar_select %p31, 0, %s30
      %s33 = sadd.s32 1, %s24
      %s34 = scalar_select %p31, %s33, %s24
      %p35 = scmp.ge.s32.totalorder %s34, 2
      %s36 = scalar_select %p35, 0, %s34
      %s37 = ssub.s32 %s24, %s36
      %p38 = scmp.eq.s32.totalorder %s37, 0
      %s40 = sadd.s32 %s39, 1
      %s41 = scalar_select %p38, %s39, %s40
      %p44 = pneg %p38
      %p45 = scmp.eq.s32.totalorder %s17, 1
      %p46 = por %p44, %p45
      %p47 = scmp.ne.s32.totalorder %s39, %s42
      %p48 = scmp.eq.s32.totalorder %s17, 0
      %p49 = por %p47, %p48
      %p50 = scmp.ne.s32.totalorder %s39, %s42
      %p51 = scmp.eq.s32.totalorder %s22, 1
      %p52 = por %p50, %p51
      %p53 = scmp.ne.s32.totalorder %s42, %s43
      %p54 = scmp.eq.s32.totalorder %s22, 0
      %p55 = por %p53, %p54
      %p56 = scmp.ne.s32.totalorder %s42, %s43
      %p57 = scmp.eq.s32.totalorder %s23, 1
      %p58 = por %p56, %p57
      %p60 = scmp.ne.s32.totalorder %s43, %s59
      %p61 = scmp.eq.s32.totalorder %s23, 0
      %p62 = por %p60, %p61
      %s64 = sadd.s32 %s63, 1
      %p67 = scmp.eq.s32.totalorder %s17, 1
      %p68 = scmp.ne.s32.totalorder %s63, %s65
      %p69 = scmp.eq.s32.totalorder %s17, 0
      %p70 = por %p68, %p69
      %p71 = scmp.ne.s32.totalorder %s63, %s65
      %p72 = scmp.eq.s32.totalorder %s22, 1
      %p73 = por %p71, %p72
      %p74 = scmp.ne.s32.totalorder %s65, %s66
      %p75 = scmp.eq.s32.totalorder %s22, 0
      %p76 = por %p74, %p75
      %p77 = scmp.ne.s32.totalorder %s65, %s66
      %p78 = scmp.eq.s32.totalorder %s23, 1
      %p79 = por %p77, %p78
      %p81 = scmp.ne.s32.totalorder %s66, %s80
      %p82 = scmp.eq.s32.totalorder %s23, 0
      %p83 = por %p81, %p82
      %s84 = ssub.s32 %s24, %s36
      %s85 = ssub.s32 %s25, %s32
      %s86 = sor.u32 %s84, %s85
      %p87 = scmp.eq.s32.totalorder %s86, 0
      %s89 = sadd.s32 %s88, 1
      %s90 = scalar_select %p87, %s88, %s89
      %p93 = pneg %p87
      %p94 = scmp.eq.s32.totalorder %s17, 1
      %p95 = por %p93, %p94
      %p96 = scmp.ne.s32.totalorder %s88, %s91
      %p97 = scmp.eq.s32.totalorder %s17, 0
      %p98 = por %p96, %p97
      %p99 = scmp.ne.s32.totalorder %s88, %s91
      %p100 = scmp.eq.s32.totalorder %s22, 1
      %p101 = por %p99, %p100
      %p102 = scmp.ne.s32.totalorder %s91, %s92
      %p103 = scmp.eq.s32.totalorder %s22, 0
      %p104 = por %p102, %p103
      %p105 = scmp.ne.s32.totalorder %s91, %s92
      %p106 = scmp.eq.s32.totalorder %s23, 1
      %p107 = por %p105, %p106
      %p109 = scmp.ne.s32.totalorder %s92, %s108
      %p110 = scmp.eq.s32.totalorder %s23, 0
      %p111 = por %p109, %p110
      %s112 = ssub.s32 %s24, %s36
      %p113 = scmp.eq.s32.totalorder %s112, 0
      %s115 = sadd.s32 %s114, 1
      %s116 = scalar_select %p113, %s114, %s115
      %p119 = pneg %p113
      %p120 = scmp.eq.s32.totalorder %s17, 1
      %p121 = por %p119, %p120
      %p122 = scmp.ne.s32.totalorder %s114, %s117
      %p123 = scmp.eq.s32.totalorder %s17, 0
      %p124 = por %p122, %p123
      %p125 = scmp.ne.s32.totalorder %s114, %s117
      %p126 = scmp.eq.s32.totalorder %s22, 1
      %p127 = por %p125, %p126
      %p128 = scmp.ne.s32.totalorder %s117, %s118
      %p129 = scmp.eq.s32.totalorder %s22, 0
      %p130 = por %p128, %p129
      %p131 = scmp.ne.s32.totalorder %s117, %s118
      %p132 = scmp.eq.s32.totalorder %s23, 1
      %p133 = por %p131, %p132
      %p135 = scmp.ne.s32.totalorder %s118, %s134
      %p136 = scmp.eq.s32.totalorder %s23, 0
      %p137 = por %p135, %p136
      %p138 = scmp.le.s32.totalorder 1, %s17
      %p139 = scmp.lt.s32.totalorder %s17, 3
      %p140 = pnand %p138, %p139
      %p141 = pneg %p140
      // Predicated region
      $region9: #{tpu_custom_call.1} parent=5 // pred_check
        _
      $region10: #{tpu_custom_call.1} parent=5 // pred_check_branch
        %143 = sbr.rel (%p140) target = $region12
      $region11: #{tpu_custom_call.1} parent=5 // pred_region
        %s144 = ssub.s32 %s17, 1
        // Predicated region
        $region13: #{tpu_custom_call.1} parent=11 // pred_check
          %p145 = pneg %p76
        $region14: #{tpu_custom_call.1} parent=11 // pred_check_branch
          %147 = sbr.rel (%p145) target = $region16
        $region15: #{tpu_custom_call.1} parent=11 // pred_region
          %149 = vsyncadd [#allocation4], 0
          %s150 = sshll.u32 %s1, 4
          %s151 = int_to_ptr.hbm [resolvable:$true] %s150
          %s152 = sshll.u32 [#allocation3], 4
          %s153 = int_to_ptr.vmem [resolvable:$true] %s152
          %158 = dma.hbm_to_vmem [thread:$0]  %s151, 3072, %s153, [#allocation4], 64, 64, 4
        $region16: #{tpu_custom_call.1} parent=11 // pred_fallthru
          _
      $region12: #{tpu_custom_call.1} parent=5 // pred_fallthru
        _
      %p159 = scmp.lt.s32.totalorder %s17, 2
      // Predicated region
      $region17: #{tpu_custom_call.1} parent=5 // pred_check
        %p160 = pneg %p159
      $region18: #{tpu_custom_call.1} parent=5 // pred_check_branch
        %162 = sbr.rel (%p160) target = $region20
      $region19: #{tpu_custom_call.1} parent=5 // pred_region
        // Predicated region
        $region21: #{tpu_custom_call.1} parent=19 // pred_check
          %p163 = pneg %p49
        $region22: #{tpu_custom_call.1} parent=19 // pred_check_branch
          %165 = sbr.rel (%p163) target = $region24
        $region23: #{tpu_custom_call.1} parent=19 // pred_region
          %p166 = scmp.lt.s32.totalorder %s24, 1
          %s167 = scalar_select %p166, %s24, 1
          %s168 = smul.addr %s167, 5
          %s169 = smul.addr %s168, 8
          %s170 = scalar_lea.vmem %s0, %s169
        $region24: #{tpu_custom_call.1} parent=19 // pred_fallthru
          _
      $region20: #{tpu_custom_call.1} parent=5 // pred_fallthru
        _
      %p171 = scmp.le.s32.totalorder 1, %s17
      %p172 = scmp.lt.s32.totalorder %s17, 3
      %p173 = pnand %p171, %p172
      %p174 = pneg %p173
      // Predicated region
      $region25: #{tpu_custom_call.1} parent=5 // pred_check
        _
      $region26: #{tpu_custom_call.1} parent=5 // pred_check_branch
        %176 = sbr.rel (%p173) target = $region28
      $region27: #{tpu_custom_call.1} parent=5 // pred_region
        %s177 = ssub.s32 %s17, 1
        // Predicated region
        $region29: #{tpu_custom_call.1} parent=27 // pred_check
          %p178 = pneg %p76
        $region30: #{tpu_custom_call.1} parent=27 // pred_check_branch
          %180 = sbr.rel (%p178) target = $region32
        $region31: #{tpu_custom_call.1} parent=27 // pred_region
          %182 = dma.done [#allocation4], 3072
        $region32: #{tpu_custom_call.1} parent=27 // pred_fallthru
          _
        %p183 = scmp.lt.s32.totalorder %s26, 1
        %s184 = scalar_select %p183, %s26, 1
        %s185 = smul.addr %s184, 5
        %s186 = smul.addr %s185, 8
        %s187 = scalar_lea.vmem %s0, %s186
        %p188 = pneg %p55
        %p189 = pneg %p52
        %p190 = pneg %p76
        %p191 = pneg %p73
        %p192 = pneg %p104
        %p193 = pneg %p101
        %s194 = sand.u32 %s91, 1
        %s195 = scalar_lea.sflag [#allocation5], %s194
        %s196 = sand.u32 %s91, 1
        %s197 = smul.addr %s196, 16
        %s198 = scalar_lea.vmem [#allocation6], %s197
        %p199 = pneg %p130
        %p200 = pneg %p127
        %s201 = sand.u32 %s117, 1
        %s202 = scalar_lea.sflag [#allocation8], %s201
        %s203 = sand.u32 %s117, 1
        %s204 = smul.addr %s203, 2
        %s205 = scalar_lea.vmem [#allocation7], %s204
        %p206 = scmp.lt.s32.totalorder %s26, 1
        %s207 = scalar_select %p206, %s26, 1
        %s208 = smul.addr %s207, 5
        %s209 = smul.addr %s208, 8
        %s210 = scalar_lea.vmem %s0, %s209
        %s211 = smul.u32 4, %s27
        %s212 = smul.u32 %s27, 32
        %s213 = scalar_lea.vmem %s210, %s212
        %v214 = vld [vmem:[%s213] sm:$0xff]
        %v215 = vld [vmem:[%s213 + $0x8] sm:$0xff]
        %v216 = vld [vmem:[%s213 + $0x10] sm:$0xff]
        %v217 = vld [vmem:[%s213 + $0x18] sm:$0xff]
        %v218 = vpack.c.bf16 %v214, %v214
        %v219 = vpack.c.bf16 %v215, %v215
        %v220 = vpack.c.bf16 %v216, %v216
        %v221 = vpack.c.bf16 %v217, %v217
        %s222 = sadd.s32 %s212, 1
        %s223 = scalar_lea.vmem %s210, %s222
        %v224 = vld [vmem:[%s223] sm:$0xff]
        %v225 = vld [vmem:[%s223 + $0x8] sm:$0xff]
        %v226 = vld [vmem:[%s223 + $0x10] sm:$0xff]
        %v227 = vld [vmem:[%s223 + $0x18] sm:$0xff]
        %v228 = vpack.c.bf16 %v224, %v224
        %v229 = vpack.c.bf16 %v225, %v225
        %v230 = vpack.c.bf16 %v226, %v226
        %v231 = vpack.c.bf16 %v227, %v227
        %s232 = sadd.s32 %s212, 2
        %s233 = scalar_lea.vmem %s210, %s232
        %v234 = vld [vmem:[%s233] sm:$0xff]
        %v235 = vld [vmem:[%s233 + $0x8] sm:$0xff]
        %v236 = vld [vmem:[%s233 + $0x10] sm:$0xff]
        %v237 = vld [vmem:[%s233 + $0x18] sm:$0xff]
        %v238 = vpack.c.bf16 %v234, %v234
        %v239 = vpack.c.bf16 %v235, %v235
        %v240 = vpack.c.bf16 %v236, %v236
        %v241 = vpack.c.bf16 %v237, %v237
        %v246 = vunpack.c.l.b16 %v218
        %v247 = vunpack.c.l.b16 %v219
        %v248 = vunpack.c.l.b16 %v220
        %v249 = vunpack.c.l.b16 %v221
        %v250 = vpack.c.b16 %v247, %v246
        %v251 = vpack.c.b16 %v249, %v248
        %v258 = vunpack.c.l.b16 %v228
        %v259 = vunpack.c.l.b16 %v229
        %v260 = vunpack.c.l.b16 %v230
        %v261 = vunpack.c.l.b16 %v231
        %v262 = vpack.c.b16 %v259, %v258
        %v263 = vpack.c.b16 %v261, %v260
        %v270 = vunpack.c.l.b16 %v238
        %v271 = vunpack.c.l.b16 %v239
        %v272 = vunpack.c.l.b16 %v240
        %v273 = vunpack.c.l.b16 %v241
        %v274 = vpack.c.b16 %v271, %v270
        %v275 = vpack.c.b16 %v273, %v272
        %v278 = vld [vmem:[#allocation3] sm:$0xf]
        %v279 = vld [vmem:[#allocation3 + $0x4] sm:$0xf]
        %v280 = vld [vmem:[#allocation3 + $0x8] sm:$0xf]
        %v281 = vld [vmem:[#allocation3 + $0xc] sm:$0xf]
        %v282 = vld [vmem:[#allocation3 + $0x10] sm:$0xf]
        %v283 = vld [vmem:[#allocation3 + $0x14] sm:$0xf]
        %v284 = vld [vmem:[#allocation3 + $0x18] sm:$0xf]
        %v285 = vld [vmem:[#allocation3 + $0x1c] sm:$0xf]
        %v286 = vld [vmem:[#allocation3 + $0x20] sm:$0xf]
        %v287 = vld [vmem:[#allocation3 + $0x24] sm:$0xf]
        %v288 = vld [vmem:[#allocation3 + $0x28] sm:$0xf]
        %v289 = vld [vmem:[#allocation3 + $0x2c] sm:$0xf]
        %v290 = vld [vmem:[#allocation3 + $0x30] sm:$0xf]
        %v291 = vld [vmem:[#allocation3 + $0x34] sm:$0xf]
        %v292 = vld [vmem:[#allocation3 + $0x38] sm:$0xf]
        %v293 = vld [vmem:[#allocation3 + $0x3c] sm:$0xf]
        %v294 = vld [vmem:[#allocation3 + $0x40] sm:$0xf]
        %v295 = vld [vmem:[#allocation3 + $0x44] sm:$0xf]
        %v296 = vld [vmem:[#allocation3 + $0x48] sm:$0xf]
        %v297 = vld [vmem:[#allocation3 + $0x4c] sm:$0xf]
        %v298 = vld [vmem:[#allocation3 + $0x50] sm:$0xf]
        %v299 = vld [vmem:[#allocation3 + $0x54] sm:$0xf]
        %v300 = vld [vmem:[#allocation3 + $0x58] sm:$0xf]
        %v301 = vld [vmem:[#allocation3 + $0x5c] sm:$0xf]
        %v302 = vld [vmem:[#allocation3 + $0x60] sm:$0xf]
        %v303 = vld [vmem:[#allocation3 + $0x64] sm:$0xf]
        %v304 = vld [vmem:[#allocation3 + $0x68] sm:$0xf]
        %v305 = vld [vmem:[#allocation3 + $0x6c] sm:$0xf]
        %v306 = vld [vmem:[#allocation3 + $0x70] sm:$0xf]
        %v307 = vld [vmem:[#allocation3 + $0x74] sm:$0xf]
        %v308 = vld [vmem:[#allocation3 + $0x78] sm:$0xf]
        %v309 = vld [vmem:[#allocation3 + $0x7c] sm:$0xf]
        %v310 = vld [vmem:[#allocation3 + $0x80] sm:$0xf]
        %v311 = vld [vmem:[#allocation3 + $0x84] sm:$0xf]
        %v312 = vld [vmem:[#allocation3 + $0x88] sm:$0xf]
        %v313 = vld [vmem:[#allocation3 + $0x8c] sm:$0xf]
        %v314 = vld [vmem:[#allocation3 + $0x90] sm:$0xf]
        %v315 = vld [vmem:[#allocation3 + $0x94] sm:$0xf]
        %v316 = vld [vmem:[#allocation3 + $0x98] sm:$0xf]
        %v317 = vld [vmem:[#allocation3 + $0x9c] sm:$0xf]
        %v318 = vld [vmem:[#allocation3 + $0xa0] sm:$0xf]
        %v319 = vld [vmem:[#allocation3 + $0xa4] sm:$0xf]
        %v320 = vld [vmem:[#allocation3 + $0xa8] sm:$0xf]
        %v321 = vld [vmem:[#allocation3 + $0xac] sm:$0xf]
        %v322 = vld [vmem:[#allocation3 + $0xb0] sm:$0xf]
        %v323 = vld [vmem:[#allocation3 + $0xb4] sm:$0xf]
        %v324 = vld [vmem:[#allocation3 + $0xb8] sm:$0xf]
        %v325 = vld [vmem:[#allocation3 + $0xbc] sm:$0xf]
        %v374 = vunpack.c.l.b16 %v278
        %v375 = vunpack.c.l.b16 %v279
        %v376 = vunpack.c.l.b16 %v280
        %v377 = vunpack.c.l.b16 %v281
        %v378 = vunpack.c.l.b16 %v282
        %v379 = vunpack.c.l.b16 %v283
        %v380 = vunpack.c.l.b16 %v284
        %v381 = vunpack.c.l.b16 %v285
        %v382 = vunpack.c.l.b16 %v286
        %v383 = vunpack.c.l.b16 %v287
        %v384 = vunpack.c.l.b16 %v288
        %v385 = vunpack.c.l.b16 %v289
        %v386 = vunpack.c.l.b16 %v290
        %v387 = vunpack.c.l.b16 %v291
        %v388 = vunpack.c.l.b16 %v292
        %v389 = vunpack.c.l.b16 %v293
        %v390 = vunpack.c.l.b16 %v294
        %v391 = vunpack.c.l.b16 %v295
        %v392 = vunpack.c.l.b16 %v296
        %v393 = vunpack.c.l.b16 %v297
        %v394 = vunpack.c.l.b16 %v298
        %v395 = vunpack.c.l.b16 %v299
        %v396 = vunpack.c.l.b16 %v300
        %v397 = vunpack.c.l.b16 %v301
        %v398 = vunpack.c.l.b16 %v302
        %v399 = vunpack.c.l.b16 %v303
        %v400 = vunpack.c.l.b16 %v304
        %v401 = vunpack.c.l.b16 %v305
        %v402 = vunpack.c.l.b16 %v306
        %v403 = vunpack.c.l.b16 %v307
        %v404 = vunpack.c.l.b16 %v308
        %v405 = vunpack.c.l.b16 %v309
        %v406 = vunpack.c.l.b16 %v310
        %v407 = vunpack.c.l.b16 %v311
        %v408 = vunpack.c.l.b16 %v312
        %v409 = vunpack.c.l.b16 %v313
        %v410 = vunpack.c.l.b16 %v314
        %v411 = vunpack.c.l.b16 %v315
        %v412 = vunpack.c.l.b16 %v316
        %v413 = vunpack.c.l.b16 %v317
        %v414 = vunpack.c.l.b16 %v318
        %v415 = vunpack.c.l.b16 %v319
        %v416 = vunpack.c.l.b16 %v320
        %v417 = vunpack.c.l.b16 %v321
        %v418 = vunpack.c.l.b16 %v322
        %v419 = vunpack.c.l.b16 %v323
        %v420 = vunpack.c.l.b16 %v324
        %v421 = vunpack.c.l.b16 %v325
        %v422 = vpack.c.b16 %v375, %v374
        %v423 = vpack.c.b16 %v377, %v376
        %v424 = vpack.c.b16 %v379, %v378
        %v425 = vpack.c.b16 %v381, %v380
        %v426 = vpack.c.b16 %v383, %v382
        %v427 = vpack.c.b16 %v385, %v384
        %v428 = vpack.c.b16 %v387, %v386
        %v429 = vpack.c.b16 %v389, %v388
        %v430 = vpack.c.b16 %v391, %v390
        %v431 = vpack.c.b16 %v393, %v392
        %v432 = vpack.c.b16 %v395, %v394
        %v433 = vpack.c.b16 %v397, %v396
        %v434 = vpack.c.b16 %v399, %v398
        %v435 = vpack.c.b16 %v401, %v400
        %v436 = vpack.c.b16 %v403, %v402
        %v437 = vpack.c.b16 %v405, %v404
        %v438 = vpack.c.b16 %v407, %v406
        %v439 = vpack.c.b16 %v409, %v408
        %v440 = vpack.c.b16 %v411, %v410
        %v441 = vpack.c.b16 %v413, %v412
        %v442 = vpack.c.b16 %v415, %v414
        %v443 = vpack.c.b16 %v417, %v416
        %v444 = vpack.c.b16 %v419, %v418
        %v445 = vpack.c.b16 %v421, %v420
        %470 = vmatpush.bf16.msra.mxu0 %v429
        %471 = vmatpush.bf16.msra.mxu0 %v428
        %472 = vmatpush.bf16.msra.mxu0 %v427
        %473 = vmatpush.bf16.msra.mxu0 %v426
        %474 = vmatpush.bf16.msra.mxu0 %v425
        %475 = vmatpush.bf16.msra.mxu0 %v424
        %476 = vmatpush.bf16.msra.mxu0 %v423
        %477 = vmatpush.bf16.msra.mxu0 %v422
        %478 = vmatmul.bf16.gmra.mxu0 %v250
        %v479 = vpop.f32.mrf.mxu0
        %v480 = vadd.f32 0.0, %v479
        %v481 = vpop.f32.mrf.mxu0
        %v482 = vadd.f32 0.0, %v481
        %483 = vmatmul.bf16.gmra.mxu0 %v251
        %v484 = vpop.f32.mrf.mxu0
        %v485 = vadd.f32 0.0, %v484
        %v486 = vpop.f32.mrf.mxu0
        %v487 = vadd.f32 0.0, %v486
        %488 = vdwg.mxu0
        %489 = vmatpush.bf16.msra.mxu0 %v437
        %490 = vmatpush.bf16.msra.mxu0 %v436
        %491 = vmatpush.bf16.msra.mxu0 %v435
        %492 = vmatpush.bf16.msra.mxu0 %v434
        %493 = vmatpush.bf16.msra.mxu0 %v433
        %494 = vmatpush.bf16.msra.mxu0 %v432
        %495 = vmatpush.bf16.msra.mxu0 %v431
        %496 = vmatpush.bf16.msra.mxu0 %v430
        %497 = vmatmul.bf16.gmra.mxu0 %v262
        %v498 = vpop.f32.mrf.mxu0
        %v499 = vadd.f32 %v480, %v498
        %v500 = vpop.f32.mrf.mxu0
        %v501 = vadd.f32 %v482, %v500
        %502 = vmatmul.bf16.gmra.mxu0 %v263
        %v503 = vpop.f32.mrf.mxu0
        %v504 = vadd.f32 %v485, %v503
        %v505 = vpop.f32.mrf.mxu0
        %v506 = vadd.f32 %v487, %v505
        %507 = vdwg.mxu0
        %508 = vmatpush.bf16.msra.mxu0 %v445
        %509 = vmatpush.bf16.msra.mxu0 %v444
        %510 = vmatpush.bf16.msra.mxu0 %v443
        %511 = vmatpush.bf16.msra.mxu0 %v442
        %512 = vmatpush.bf16.msra.mxu0 %v441
        %513 = vmatpush.bf16.msra.mxu0 %v440
        %514 = vmatpush.bf16.msra.mxu0 %v439
        %515 = vmatpush.bf16.msra.mxu0 %v438
        %516 = vmatmul.bf16.gmra.mxu0 %v274
        %v517 = vpop.f32.mrf.mxu0
        %v518 = vadd.f32 %v499, %v517
        %v519 = vpop.f32.mrf.mxu0
        %v520 = vadd.f32 %v501, %v519
        %521 = vmatmul.bf16.gmra.mxu0 %v275
        %v522 = vpop.f32.mrf.mxu0
        %v523 = vadd.f32 %v504, %v522
        %v524 = vpop.f32.mrf.mxu0
        %v525 = vadd.f32 %v506, %v524
        %526 = vdwg.mxu0
        %v527 = vpack.c.bf16 %v518, %v518
        %v528 = vpack.c.bf16 %v520, %v520
        %v529 = vpack.c.bf16 %v523, %v523
        %v530 = vpack.c.bf16 %v525, %v525
        %531 = vst [vmem:[%s198] sm:$0xf] %v527
        %532 = vst [vmem:[%s198 + $0x4] sm:$0xf] %v528
        %533 = vst [vmem:[%s198 + $0x8] sm:$0xf] %v529
        %534 = vst [vmem:[%s198 + $0xc] sm:$0xf] %v530
        %p535 = scmp.eq.s32.totalorder %s27, 0
        // Predicated region
        $region33: #{tpu_custom_call.1} parent=27 // pred_check
          %p536 = pneg %p535
        $region34: #{tpu_custom_call.1} parent=27 // pred_check_branch
          %538 = sbr.rel (%p536) target = $region36
        $region35: #{tpu_custom_call.1} parent=27 // pred_region
          %539 = vst [vmem:[#allocation2] sm:$0x3] 0.0
        $region36: #{tpu_custom_call.1} parent=27 // pred_fallthru
          _
        %v540 = vld [vmem:[#allocation2] sm:$0x3]
        %v541 = vadd.f32 %v518, %v520
        %v542 = vadd.f32 %v541, %v523
        %v543 = vadd.f32 %v542, %v525
        %v544 = vrot.slane %v543, 4
        %v545 = vadd.f32 %v543, %v544
        %v546 = vrot.slane %v545, 2
        %v547 = vadd.f32 %v545, %v546
        %v548 = vrot.slane %v547, 1
        %v549 = vadd.f32 %v547, %v548
        %v550 = vmul.f32 %v518, %v518
        %v551 = vmul.f32 %v520, %v520
        %v552 = vmul.f32 %v523, %v523
        %v553 = vmul.f32 %v525, %v525
        %v554 = vadd.f32 %v550, %v551
        %v555 = vadd.f32 %v554, %v552
        %v556 = vadd.f32 %v555, %v553
        %v557 = vrot.slane %v556, 4
        %v558 = vadd.f32 %v556, %v557
        %v559 = vrot.slane %v558, 2
        %v560 = vadd.f32 %v558, %v559
        %v561 = vrot.slane %v560, 1
        %v562 = vadd.f32 %v560, %v561
        %vm563 = vcmask 1040384
        %v564 = vsel %vm563, %v549, %v562
        %v565 = vadd.f32 %v540, %v564
        %566 = vst [vmem:[#allocation2] sm:$0x3] %v565
        // Predicated region
        $region37: #{tpu_custom_call.1} parent=27 // pred_check
          %p567 = pneg %p535
        $region38: #{tpu_custom_call.1} parent=27 // pred_check_branch
          %569 = sbr.rel (%p567) target = $region40
        $region39: #{tpu_custom_call.1} parent=27 // pred_region
          %v570 = vld [vmem:[#allocation2] sm:$0x3]
          %571 = vst [vmem:[%s205] sm:$0x3] %v570
        $region40: #{tpu_custom_call.1} parent=27 // pred_fallthru
          _
        %s572 = sand.u32 %s91, 1
        %s573 = scalar_lea.sflag [#allocation5], %s572
        %s574 = sand.u32 %s91, 1
        %s575 = smul.addr %s574, 16
        %s576 = scalar_lea.vmem [#allocation6], %s575
        %s577 = sand.u32 %s117, 1
        %s578 = scalar_lea.sflag [#allocation8], %s577
        %s579 = sand.u32 %s117, 1
        %s580 = smul.addr %s579, 2
        %s581 = scalar_lea.vmem [#allocation7], %s580
        // Predicated region
        $region41: #{tpu_custom_call.1} parent=27 // pred_check
          %p582 = pneg %p101
        $region42: #{tpu_custom_call.1} parent=27 // pred_check_branch
          %584 = sbr.rel (%p582) target = $region44
        $region43: #{tpu_custom_call.1} parent=27 // pred_region
          %s585 = smul.u32 4, %s27
          %587 = vsyncadd %s573, 0
          %s588 = smul.addr %s26, 4
          %s589 = sadd.s32 %s585, %s588
          %s590 = smul.addr %s589, 4
          %s591 = scalar_lea.hbm %s2, %s590
          %s592 = sshll.u32 %s576, 4
          %s593 = int_to_ptr.vmem [resolvable:$true] %s592
          %s594 = sshll.u32 %s591, 4
          %s595 = int_to_ptr.hbm [resolvable:$true] %s594
          %600 = dma.vmem_to_hbm [thread:$0]  %s593, 256, %s595, %s573, 64, 64, 4
        $region44: #{tpu_custom_call.1} parent=27 // pred_fallthru
          _
        // Predicated region
        $region45: #{tpu_custom_call.1} parent=27 // pred_check
          %p601 = pneg %p127
        $region46: #{tpu_custom_call.1} parent=27 // pred_check_branch
          %603 = sbr.rel (%p601) target = $region48
        $region47: #{tpu_custom_call.1} parent=27 // pred_region
          %605 = vsyncadd %s578, 0
          %s606 = smul.addr %s26, 2
          %s607 = scalar_lea.hbm %s3, %s606
          %s609 = sshll.u32 %s581, 4
          %s610 = int_to_ptr.vmem [resolvable:$true] %s609
          %s611 = sshll.u32 %s607, 4
          %s612 = int_to_ptr.hbm [resolvable:$true] %s611
          %614 = dma.vmem_to_hbm [thread:$0]  %s610, 32, %s612, %s578
        $region48: #{tpu_custom_call.1} parent=27 // pred_fallthru
          _
      $region28: #{tpu_custom_call.1} parent=5 // pred_fallthru
        _
      %p615 = scmp.le.s32.totalorder 2, %s17
      // Predicated region
      $region49: #{tpu_custom_call.1} parent=5 // pred_check
        %p616 = pneg %p615
      $region50: #{tpu_custom_call.1} parent=5 // pred_check_branch
        %618 = sbr.rel (%p616) target = $region52
      $region51: #{tpu_custom_call.1} parent=5 // pred_region
        %s619 = ssub.s32 %s17, 2
        // Predicated region
        $region53: #{tpu_custom_call.1} parent=51 // pred_check
          %p620 = pneg %p107
        $region54: #{tpu_custom_call.1} parent=51 // pred_check_branch
          %622 = sbr.rel (%p620) target = $region56
        $region55: #{tpu_custom_call.1} parent=51 // pred_region
          %s623 = sand.u32 %s92, 1
          %s624 = scalar_lea.sflag [#allocation5], %s623
          %s625 = sand.u32 %s92, 1
          %s626 = smul.addr %s625, 16
          %s627 = scalar_lea.vmem [#allocation6], %s626
          %629 = dma.done %s624, 256
        $region56: #{tpu_custom_call.1} parent=51 // pred_fallthru
          _
        // Predicated region
        $region57: #{tpu_custom_call.1} parent=51 // pred_check
          %p630 = pneg %p133
        $region58: #{tpu_custom_call.1} parent=51 // pred_check_branch
          %632 = sbr.rel (%p630) target = $region60
        $region59: #{tpu_custom_call.1} parent=51 // pred_region
          %s633 = sand.u32 %s118, 1
          %s634 = scalar_lea.sflag [#allocation8], %s633
          %s635 = sand.u32 %s118, 1
          %s636 = smul.addr %s635, 2
          %s637 = scalar_lea.vmem [#allocation7], %s636
          %639 = dma.done %s634, 32
        $region60: #{tpu_custom_call.1} parent=51 // pred_fallthru
          _
      $region52: #{tpu_custom_call.1} parent=5 // pred_fallthru
        _
    $region6: #{tpu_custom_call.1} parent=1 // loop_footer
      %s21 = sadd.s32 1, %s17
    $region7: #{tpu_custom_call.1} parent=1 // loop_footer_branch
      %16 = sbr.rel target = $region3
    $region8: #{tpu_custom_call.1} parent=1 // loop_exit
      _
    %640 = vsyncpa [#allocation4], 1
    %s641 = scalar_lea.sflag [#allocation4], 1
    %642 = vsyncpa %s641, 1
    %643 = vsyncpa [#allocation5], 1
    %s644 = scalar_lea.sflag [#allocation5], 1
    %645 = vsyncpa %s644, 1
    %646 = vsyncpa [#allocation8], 1
    %s647 = scalar_lea.sflag [#allocation8], 1
    %648 = vsyncpa %s647, 1

</llo_original>
